<compile_context>
chip_gen: v6e
topology: v6e:2x2x1
jax: 0.10.0
libtpu: 0.0.40
codegen_flags: <defaults>
</compile_context>

<pallas_src>
import jax
import jax.numpy as jnp
from jax import lax
from jax.experimental import pallas as pl
from jax.experimental.pallas import tpu as pltpu


def _halting_mlp_kernel(h_ref, w1_ref, b1_ref, w2_ref, b2_ref, out_ref):
    """sigmoid(w2 . relu(W1 @ h^T + b1) + b2), batch kept on lanes.

    h_ref  : (TB, E)  VMEM  activations, natural (batch, emb) layout
    w1_ref : (E, E)   VMEM  first Linear weight, PyTorch (out, in) layout
    b1_ref : (E, 1)   VMEM  first Linear bias as a column
    w2_ref : (E, 1)   VMEM  second Linear weight as a column (== w2.T)
    b2_ref : (1, 1)   SMEM  second Linear bias (scalar)
    out_ref: (1, TB)  VMEM  lane-dense halting probabilities
    """
    x = h_ref[...]                                             # (TB, E)
    # Layer 1 on the MXU: contract both operands on their E ("in") axis so the
    # result is (E, TB) batch-on-lanes -- no host-side transpose of h needed.
    hid = lax.dot_general(
        w1_ref[...], x,
        dimension_numbers=(((1,), (1,)), ((), ())),
        preferred_element_type=jnp.float32)                    # (E, TB) f32
    hid = jnp.maximum(hid + b1_ref[...], 0.0)                  # bias + ReLU (VPU), f32
    # Layer 2: the degenerate N=1 matmul becomes a VPU multiply + sublane
    # reduction; the result is already the lane-dense (1, TB) output row.
    # TODO(synk): for very large E on v6e/v7x (only 2 XLUs) fold this back onto
    # the MXU / into a K-tiled accumulation.
    logit = jnp.sum(hid * w2_ref[...], axis=0, keepdims=True)  # (1, TB)
    logit = logit + b2_ref[0, 0]                               # SMEM scalar
    out_ref[...] = jax.nn.sigmoid(logit).astype(out_ref.dtype)  # EUP exp/recip


def _pick_batch_tile(batch, emb_dim):
    """Batch tile: single block for small B; 128-aligned, >=2 tiles, VMEM-capped."""
    if batch < 256:
        return batch  # one block -- full-dim block is legal at any size
    # 128-aligned so the (1, tb) output stores stay unmasked (vst, not vst.msk),
    # and <= B/2 so the parallel grid has >= 2 steps (v7x megacore split).
    tb = min(512, 128 * max(1, (batch // 2) // 128))
    # VMEM budget (safe for v7x's ~32 MiB scoped default on the 64 MiB chip):
    # double-buffered (tb, E) + (1, tb) tiles plus double-buffered resident
    # weights must fit with headroom.
    budget = 24 << 20
    weight_bytes = 2 * 4 * (emb_dim * emb_dim + 2 * emb_dim)
    while tb > 128 and 2 * 4 * (emb_dim + 1) * tb + weight_bytes > budget:
        tb //= 2
    return tb
    # TODO(synk): for E so large that W1 alone exceeds the budget, tile the E
    # (K) axis with an f32 accumulator scratch instead of holding W1 resident.


def _halting_forward(h_2d, w1, b1_col, w2_col, b2_2d):
    """lambda_n = sigmoid(relu(h @ W1^T + b1) @ W2^T + b2), returned as (B,).

    Not jitted on its own -- jit it together with the caller so XLA can overlap
    the custom call with surrounding ops (see __main__).
    """
    B, E = h_2d.shape
    tb = _pick_batch_tile(B, E)
    grid = (pl.cdiv(B, tb),)
    cost = pl.CostEstimate(
        flops=2 * E * E * B + 3 * E * B,
        transcendentals=B,
        bytes_accessed=4 * (B * E + E * E + 2 * E + 1 + B),
    )
    out = pl.pallas_call(
        _halting_mlp_kernel,
        out_shape=jax.ShapeDtypeStruct((1, B), jnp.float32),
        grid=grid,
        in_specs=[
            pl.BlockSpec((tb, E), lambda i: (i, 0)),            # activations, tiled over batch
            pl.BlockSpec((E, E), lambda i: (0, 0)),             # W1 stays resident
            pl.BlockSpec((E, 1), lambda i: (0, 0)),             # b1 stays resident
            pl.BlockSpec((E, 1), lambda i: (0, 0)),             # w2 column stays resident
            pl.BlockSpec(memory_space=pltpu.MemorySpace.SMEM),  # b2 scalar in SMEM
        ],
        out_specs=pl.BlockSpec((1, tb), lambda i: (0, i)),      # lane-dense output row
        compiler_params=pltpu.CompilerParams(
            dimension_semantics=("parallel",)),                 # megacore split on v7x
        cost_estimate=cost,
    )(h_2d, w1, b1_col, w2_col, b2_2d)
    return out[0]                                               # (B,)


class HaltingModuleJAX:
    """JAX/Pallas port of the PyTorch HaltingModule."""

    def __init__(self, embeddings_dim, max_response_step, key):
        self.embeddings_dim = embeddings_dim
        self.max_response_step = max_response_step
        E = embeddings_dim
        k1, k2, k3, k4 = jax.random.split(key, 4)
        bound = 1.0 / float(jnp.sqrt(E))
        # PyTorch nn.Linear layout: weight (out, in), bias (out,)
        self.w1 = jax.random.uniform(k1, (E, E), jnp.float32, -bound, bound)
        self.b1 = jax.random.uniform(k2, (E,), jnp.float32, -bound, bound)
        self.w2 = jax.random.uniform(k3, (1, E), jnp.float32, -bound, bound)
        self.b2 = jax.random.uniform(k4, (1,), jnp.float32, -bound, bound)
        # bf16 for the MXU operands once E is big enough to matter; f32
        # accumulation + f32 epilogue always (required on v5e's VPU/EUP).
        self._compute_dtype = jnp.bfloat16 if E >= 512 else jnp.float32
        # Kernel-ready parameters, prepared ONCE (no per-call transposes/reshapes).
        self._w1_k = self.w1.astype(self._compute_dtype)   # (E, E), (out, in) layout
        self._b1_col = self.b1.reshape(E, 1)                # (E, 1)
        self._w2_col = self.w2.reshape(E, 1)                # (E, 1) == w2.T
        self._b2_2d = self.b2.reshape(1, 1)                 # (1, 1), placed in SMEM

    def __call__(self, h, step):
        # torch's h.squeeze(0): drops the leading dim only if it equals 1.
        h_2d = h[0] if (h.ndim == 3 and h.shape[0] == 1) else h
        # TODO(synk): PyTorch squeeze(0) on a 3-D h with leading dim != 1 feeds
        # a rank-3 tensor to nn.Linear; that rank-3 path is not supported here.
        batch_size = h_2d.shape[0]
        h_2d = h_2d.astype(self._compute_dtype)

        def run_mlp():
            return _halting_forward(h_2d, self._w1_k, self._b1_col,
                                    self._w2_col, self._b2_2d)

        # `step` may be a host-side Python int (as in the PyTorch module) or a
        # traced value when the outer model is jitted / scanned.
        try:
            concrete_step = int(step)
        except (TypeError, jax.errors.ConcretizationTypeError):
            concrete_step = None

        if concrete_step is not None:                    # host-side branch
            if concrete_step == self.max_response_step:
                return jnp.ones((batch_size,), dtype=jnp.float32)
            return run_mlp()

        lam = run_mlp()                                  # traced-step branch
        return jnp.where(step == self.max_response_step, jnp.ones_like(lam), lam)


if __name__ == "__main__":
    key = jax.random.PRNGKey(0)
    k_params, k_h = jax.random.split(key)

    embeddings_dim = 32
    max_response_step = 5
    batch = 8

    module = HaltingModuleJAX(embeddings_dim, max_response_step, k_params)
    h = jax.random.normal(k_h, (1, batch, embeddings_dim), dtype=jnp.float32)

    # In production the halting MLP is jitted together with its caller so XLA
    # can fuse/overlap the tiny custom call; emulate that by jitting the call
    # site (step is static, matching the PyTorch host-side branch).
    fwd = jax.jit(module.__call__, static_argnames="step")

    # Normal step: runs the Pallas MLP kernel.
    lambda_n = jax.block_until_ready(fwd(h, step=1))
    assert lambda_n.shape == (batch,)
    assert bool(jnp.all((lambda_n >= 0.0) & (lambda_n <= 1.0)))

    # Reference check against plain JAX (PyTorch-layout math).
    h_2d = h[0]
    ref = jax.nn.sigmoid(
        jnp.maximum(h_2d @ module.w1.T + module.b1, 0.0) @ module.w2.T + module.b2
    )[:, 0]
    assert bool(jnp.allclose(lambda_n, ref, atol=1e-5, rtol=1e-5))

    # Max-step branch (host-side step): ones.
    lambda_last = jax.block_until_ready(fwd(h, step=max_response_step))
    assert lambda_last.shape == (batch,)
    assert bool(jnp.all(lambda_last == 1.0))

    # Traced-step path (step arrives as a device scalar inside jit).
    traced_fwd = jax.jit(lambda hh, ss: module(hh, ss))
    lam_tr_last = jax.block_until_ready(traced_fwd(h, jnp.int32(max_response_step)))
    assert bool(jnp.all(lam_tr_last == 1.0))
    lam_tr = jax.block_until_ready(traced_fwd(h, jnp.int32(1)))
    assert bool(jnp.allclose(lam_tr, ref, atol=1e-5, rtol=1e-5))

    print("KERNEL_OK")
</pallas_src>

<mosaic_0001>
module attributes {stable_mosaic.version = 11 : i64} {
  func.func @_halting_mlp_kernel(%arg0: i32, %arg1: memref<8x32xf32, #tpu.memory_space<vmem>>, %arg2: memref<32x32xf32, #tpu.memory_space<vmem>>, %arg3: memref<32x1xf32, #tpu.memory_space<vmem>>, %arg4: memref<32x1xf32, #tpu.memory_space<vmem>>, %arg5: memref<1x1xf32, #tpu.memory_space<smem>>, %arg6: memref<1x8xf32, #tpu.memory_space<vmem>>) attributes {dimension_semantics = [#tpu.dimension_semantics<parallel>], iteration_bounds = array<i64: 1>, scalar_prefetch = 0 : i64, scratch_operands = 0 : i64, tpu.core_type = #tpu.core_type<tc>, window_params = [{transform_indices = @transform_0, window_bounds = array<i64: 8, 32>}, {pipeline_mode = #tpu.pipeline_mode<synchronous>, transform_indices = @transform_1, window_bounds = array<i64: 32, 32>}, {pipeline_mode = #tpu.pipeline_mode<synchronous>, transform_indices = @transform_2, window_bounds = array<i64: 32, 1>}, {pipeline_mode = #tpu.pipeline_mode<synchronous>, transform_indices = @transform_3, window_bounds = array<i64: 32, 1>}, {transform_indices = @transform_4, window_bounds = array<i64: 1, 1>}, {transform_indices = @transform_5, window_bounds = array<i64: 1, 8>}]} {
    %c0 = arith.constant 0 : index
    %c0_0 = arith.constant 0 : index
    %0 = vector.load %arg1[%c0, %c0_0] : memref<8x32xf32, #tpu.memory_space<vmem>>, vector<8x32xf32>
    %c0_1 = arith.constant 0 : index
    %c0_2 = arith.constant 0 : index
    %1 = vector.load %arg2[%c0_1, %c0_2] : memref<32x32xf32, #tpu.memory_space<vmem>>, vector<32x32xf32>
    %cst = arith.constant dense<0.000000e+00> : vector<32x8xf32>
    %2 = tpu.matmul %1, %0, %cst {dimension_numbers = #tpu.dot_dimension_numbers<[1], [1], [0], [0], [0, 0, 1, 0], [], []>} : vector<32x32xf32>, vector<8x32xf32>, vector<32x8xf32> -> vector<32x8xf32>
    %c0_3 = arith.constant 0 : index
    %c0_4 = arith.constant 0 : index
    %3 = vector.load %arg3[%c0_3, %c0_4] : memref<32x1xf32, #tpu.memory_space<vmem>>, vector<32x1xf32>
    %4 = vector.broadcast %3 : vector<32x1xf32> to vector<32x8xf32>
    %5 = arith.addf %2, %4 : vector<32x8xf32>
    %cst_5 = arith.constant 0.000000e+00 : f32
    %6 = vector.broadcast %cst_5 : f32 to vector<32x8xf32>
    %7 = arith.maximumf %5, %6 : vector<32x8xf32>
    %c0_6 = arith.constant 0 : index
    %c0_7 = arith.constant 0 : index
    %8 = vector.load %arg4[%c0_6, %c0_7] : memref<32x1xf32, #tpu.memory_space<vmem>>, vector<32x1xf32>
    %9 = vector.broadcast %8 : vector<32x1xf32> to vector<32x8xf32>
    %10 = arith.mulf %7, %9 : vector<32x8xf32>
    %cst_8 = arith.constant dense<0.000000e+00> : vector<8xf32>
    %11 = vector.multi_reduction <add>, %10, %cst_8 [0] : vector<32x8xf32> to vector<8xf32>
    %12 = vector.shape_cast %11 : vector<8xf32> to vector<1x8xf32>
    %c0_9 = arith.constant 0 : index
    %c0_10 = arith.constant 0 : index
    %13 = memref.load %arg5[%c0_9, %c0_10] : memref<1x1xf32, #tpu.memory_space<smem>>
    %14 = vector.broadcast %13 : f32 to vector<1x8xf32>
    %15 = arith.addf %12, %14 : vector<1x8xf32>
    %16 = arith.negf %15 : vector<1x8xf32>
    %17 = math.exp %16 : vector<1x8xf32>
    %cst_11 = arith.constant 1.000000e+00 : f32
    %18 = vector.broadcast %cst_11 : f32 to vector<1x8xf32>
    %19 = arith.addf %18, %17 : vector<1x8xf32>
    %20 = arith.divf %18, %19 : vector<1x8xf32>
    %c0_12 = arith.constant 0 : index
    %c0_13 = arith.constant 0 : index
    %21 = vector.load %arg6[%c0_12, %c0_13] : memref<1x8xf32, #tpu.memory_space<vmem>>, vector<1x8xf32>
    tpu.vector_store %arg6[%c0_12, %c0_13], %20 {strides = array<i32>} : memref<1x8xf32, #tpu.memory_space<vmem>>, vector<1x8xf32>,
    return
  }
  func.func @transform_0(%arg0: i32) -> (i32, i32) {
    %c0_i32 = arith.constant 0 : i32
    %c0_i32_0 = arith.constant 0 : i32
    return %arg0, %c0_i32 : i32, i32
  }
  func.func @transform_1(%arg0: i32) -> (i32, i32) {
    %c0_i32 = arith.constant 0 : i32
    %c0_i32_0 = arith.constant 0 : i32
    %c0_i32_1 = arith.constant 0 : i32
    return %c0_i32, %c0_i32_0 : i32, i32
  }
  func.func @transform_2(%arg0: i32) -> (i32, i32) {
    %c0_i32 = arith.constant 0 : i32
    %c0_i32_0 = arith.constant 0 : i32
    %c0_i32_1 = arith.constant 0 : i32
    return %c0_i32, %c0_i32_0 : i32, i32
  }
  func.func @transform_3(%arg0: i32) -> (i32, i32) {
    %c0_i32 = arith.constant 0 : i32
    %c0_i32_0 = arith.constant 0 : i32
    %c0_i32_1 = arith.constant 0 : i32
    return %c0_i32, %c0_i32_0 : i32, i32
  }
  func.func @transform_4(%arg0: i32) -> (i32, i32) {
    %c0_i32 = arith.constant 0 : i32
    %c0_i32_0 = arith.constant 0 : i32
    %c0_i32_1 = arith.constant 0 : i32
    return %c0_i32, %c0_i32_0 : i32, i32
  }
  func.func @transform_5(%arg0: i32) -> (i32, i32) {
    %c0_i32 = arith.constant 0 : i32
    %c0_i32_0 = arith.constant 0 : i32
    return %c0_i32, %arg0 : i32, i32
  }
}

</mosaic_0001>

<llo_original>
// kernel: a_call__.1
$region0: #{a_call__.1}
  #allocation0 [shape = 'u32[]', space=smem, size = 0x4, offset = 0x4, fixed_abs, tag = 'smem constant byte address 0x4 - core index']
  #allocation1 [shape = 'u32[144,128]{1,0:T(1,128)}', space=vmem, size = 0x12000, scoped, tag = 'internal scratch']
  #allocation2 [shape = 'f32[1,1]{1,0:T(1,128)S(6)}', space=smem, size = 0x200, scoped, tag = 'scoped memory for a_call__.1']
  %s0 = inlined_call_operand.hbm [shape: f32[8,32], index: 0, kind: input, shape index: {}]
  %s1 = inlined_call_operand.hbm [shape: f32[32,32], index: 1, kind: input, shape index: {}]
  %s2 = inlined_call_operand.hbm [shape: f32[32,1], index: 2, kind: input, shape index: {}]
  %s3 = inlined_call_operand.hbm [shape: f32[32,1], index: 3, kind: input, shape index: {}]
  %s4 = inlined_call_operand.<no memory space> [shape: f32[1,1], index: 4, kind: input, shape index: {}]
  %s5 = inlined_call_operand.hbm [shape: f32[1,8], index: 5, kind: output, shape index: {}]
  %s6 = sld [smem:[#allocation0]]
  $region46: #{a_call__.1} parent=0
    _
  %s8 = ssub.s32 1, %s6
  %s9 = scalar_select 0, %s8, %s6
  %10 = sst [smem:[#allocation2]] %s4
  $region1: #{a_call__.1} parent=0
    #allocation3 [shape = 'u8[4096]{0}', space=vmem, size = 0x1000, scoped, tag = 'input window, operand 0, single buffered']
    #allocation4 [shape = 's32[1]{0}', space=sflag, size = 0x4, scoped, tag = 'scoped memory for a_call__.1']
    #allocation5 [shape = 's32[1]{0}', space=sflag, size = 0x4, scoped, tag = 'scoped memory for a_call__.1']
    #allocation6 [shape = 'u8[16384]{0}', space=vmem, size = 0x4000, scoped, tag = 'input window, operand 1, single buffered']
    #allocation7 [shape = 's32[1]{0}', space=sflag, size = 0x4, scoped, tag = 'scoped memory for a_call__.1']
    #allocation8 [shape = 'u8[16384]{0}', space=vmem, size = 0x4000, scoped, tag = 'input window, operand 2, single buffered']
    #allocation9 [shape = 'u8[16384]{0}', space=vmem, size = 0x4000, scoped, tag = 'input window, operand 3, single buffered']
    #allocation10 [shape = 's32[1]{0}', space=sflag, size = 0x4, scoped, tag = 'scoped memory for a_call__.1']
    #allocation11 [shape = 'u8[512]{0}', space=vmem, size = 0x400, scoped, tag = 'output window, operand 0, single buffered']
    %11 = vsyncpa [#allocation4], 0
    %12 = vsyncpa [#allocation7], 0
    %13 = vsyncpa [#allocation10], 0
    %14 = vsyncpa [#allocation5], 0
    // Predicated region
    $region2: #{a_call__.1} parent=1 // pred_check
      _
    $region3: #{a_call__.1} parent=1 // pred_check_branch
      %16 = sbr.rel (0) target = $region5
    $region4: #{a_call__.1} parent=1 // pred_region
      %s18 = ssub.s32 128, 128
      %19 = vsyncadd [#allocation4], %s18
      %s21 = sshll.u32 [#allocation3], 4
      %s22 = int_to_ptr.vmem [resolvable:$true] %s21
      %24 = dma.hbm_to_vmem [thread:$0]  %s0, 128, %s22, [#allocation4]
    $region5: #{a_call__.1} parent=1 // pred_fallthru
      _
    // Predicated region
    $region6: #{a_call__.1} parent=1 // pred_check
      _
    $region7: #{a_call__.1} parent=1 // pred_check_branch
      %26 = sbr.rel (0) target = $region9
    $region8: #{a_call__.1} parent=1 // pred_region
      %s28 = ssub.s32 512, 512
      %29 = vsyncadd [#allocation7], %s28
      %s30 = sshll.u32 [#allocation6], 4
      %s31 = int_to_ptr.vmem [resolvable:$true] %s30
      %36 = dma.hbm_to_vmem [thread:$0]  %s1, 512, %s31, [#allocation7], 128, 128, 8
    $region9: #{a_call__.1} parent=1 // pred_fallthru
      _
    // Predicated region
    $region10: #{a_call__.1} parent=1 // pred_check
      _
    $region11: #{a_call__.1} parent=1 // pred_check_branch
      %38 = sbr.rel (0) target = $region13
    $region12: #{a_call__.1} parent=1 // pred_region
      %s40 = ssub.s32 512, 512
      %41 = vsyncadd [#allocation7], %s40
      %s42 = sshll.u32 [#allocation8], 4
      %s43 = int_to_ptr.vmem [resolvable:$true] %s42
      %48 = dma.hbm_to_vmem [thread:$0]  %s2, 512, %s43, [#allocation7], 128, 128, 8
    $region13: #{a_call__.1} parent=1 // pred_fallthru
      _
    // Predicated region
    $region14: #{a_call__.1} parent=1 // pred_check
      _
    $region15: #{a_call__.1} parent=1 // pred_check_branch
      %50 = sbr.rel (0) target = $region17
    $region16: #{a_call__.1} parent=1 // pred_region
      %s52 = ssub.s32 512, 512
      %53 = vsyncadd [#allocation10], %s52
      %s54 = sshll.u32 [#allocation9], 4
      %s55 = int_to_ptr.vmem [resolvable:$true] %s54
      %60 = dma.hbm_to_vmem [thread:$0]  %s3, 512, %s55, [#allocation10], 128, 128, 8
    $region17: #{a_call__.1} parent=1 // pred_fallthru
      _
    // Predicated region
    $region18: #{a_call__.1} parent=1 // pred_check
      _
    $region19: #{a_call__.1} parent=1 // pred_check_branch
      %62 = sbr.rel (0) target = $region21
    $region20: #{a_call__.1} parent=1 // pred_region
      _
    $region21: #{a_call__.1} parent=1 // pred_fallthru
      _
    // Predicated region
    $region22: #{a_call__.1} parent=1 // pred_check
      _
    $region23: #{a_call__.1} parent=1 // pred_check_branch
      %64 = sbr.rel (0) target = $region25
    $region24: #{a_call__.1} parent=1 // pred_region
      %65 = dma.done [#allocation4], 128
    $region25: #{a_call__.1} parent=1 // pred_fallthru
      _
    // Predicated region
    $region26: #{a_call__.1} parent=1 // pred_check
      _
    $region27: #{a_call__.1} parent=1 // pred_check_branch
      %67 = sbr.rel (0) target = $region29
    $region28: #{a_call__.1} parent=1 // pred_region
      %68 = dma.done [#allocation7], 512
    $region29: #{a_call__.1} parent=1 // pred_fallthru
      _
    // Predicated region
    $region30: #{a_call__.1} parent=1 // pred_check
      _
    $region31: #{a_call__.1} parent=1 // pred_check_branch
      %70 = sbr.rel (0) target = $region33
    $region32: #{a_call__.1} parent=1 // pred_region
      %71 = dma.done [#allocation7], 512
    $region33: #{a_call__.1} parent=1 // pred_fallthru
      _
    // Predicated region
    $region34: #{a_call__.1} parent=1 // pred_check
      _
    $region35: #{a_call__.1} parent=1 // pred_check_branch
      %73 = sbr.rel (0) target = $region37
    $region36: #{a_call__.1} parent=1 // pred_region
      %74 = dma.done [#allocation10], 512
    $region37: #{a_call__.1} parent=1 // pred_fallthru
      _
    %v75 = vld [vmem:[#allocation3] sm:$0xff]
    %v76 = vld [vmem:[#allocation6] sm:$0xff]
    %v77 = vld [vmem:[#allocation6 + $0x8] sm:$0xff]
    %v78 = vld [vmem:[#allocation6 + $0x10] sm:$0xff]
    %v79 = vld [vmem:[#allocation6 + $0x18] sm:$0xff]
    %v80 = vld [vmem:[#allocation8] sm:$0xff]
    %v81 = vld [vmem:[#allocation8 + $0x8] sm:$0xff]
    %v82 = vld [vmem:[#allocation8 + $0x10] sm:$0xff]
    %v83 = vld [vmem:[#allocation8 + $0x18] sm:$0xff]
    %85 = vset.pattern.permute.xlu0 0
    %86 = vperm.xlu0 %85, %v80
    %v87 = vpop.permute.xlu0 %86
    %90 = vset.pattern.permute.xlu0 0
    %91 = vperm.xlu0 %90, %v81
    %v92 = vpop.permute.xlu0 %91
    %95 = vset.pattern.permute.xlu0 0
    %96 = vperm.xlu0 %95, %v82
    %v97 = vpop.permute.xlu0 %96
    %100 = vset.pattern.permute.xlu0 0
    %101 = vperm.xlu0 %100, %v83
    %v102 = vpop.permute.xlu0 %101
    %vm104 = vcmask 261120
    %v106 = vsel %vm104, %v76, 0
    %v109 = vsel %vm104, %v77, 0
    %v112 = vsel %vm104, %v78, 0
    %v115 = vsel %vm104, %v79, 0
    %v118 = vsel %vm104, %v75, 0
    %120 = vmatprep.subr.mxu0 0.0
    %121 = vmatpush1.xpose.msra.mxu0 0.0
    %122 = vmatprep.subr.mxu0 0.0
    %123 = vmatpush1.xpose.msra.mxu0 0.0
    %124 = vmatprep.subr.mxu0 0.0
    %125 = vmatpush1.xpose.msra.mxu0 0.0
    %126 = vmatprep.subr.mxu0 0.0
    %127 = vmatpush1.xpose.msra.mxu0 0.0
    %128 = vmatprep.subr.mxu0 0.0
    %129 = vmatpush1.xpose.msra.mxu0 0.0
    %130 = vmatprep.subr.mxu0 0.0
    %131 = vmatpush1.xpose.msra.mxu0 0.0
    %132 = vmatprep.subr.mxu0 0.0
    %133 = vmatpush1.xpose.msra.mxu0 0.0
    %134 = vmatprep.subr.mxu0 0.0
    %135 = vmatpush1.xpose.msra.mxu0 0.0
    %136 = vmatprep.subr.mxu0 0.0
    %137 = vmatpush1.xpose.msra.mxu0 0.0
    %138 = vmatprep.subr.mxu0 0.0
    %139 = vmatpush1.xpose.msra.mxu0 0.0
    %140 = vmatprep.subr.mxu0 0.0
    %141 = vmatpush1.xpose.msra.mxu0 0.0
    %142 = vmatprep.subr.mxu0 0.0
    %143 = vmatpush1.xpose.msra.mxu0 0.0
    %144 = vmatprep.subr.mxu0 0.0
    %145 = vmatpush1.xpose.msra.mxu0 0.0
    %146 = vmatprep.subr.mxu0 0.0
    %147 = vmatpush1.xpose.msra.mxu0 0.0
    %148 = vmatprep.subr.mxu0 0.0
    %149 = vmatpush1.xpose.msra.mxu0 0.0
    %150 = vmatprep.subr.mxu0 0.0
    %151 = vmatpush1.xpose.msra.mxu0 %v118
    %152 = vmatprep.subr.mxu0 0.0
    %153 = vmatpush2.xpose.msra.mxu0 0.0
    %154 = vmatprep.subr.mxu0 0.0
    %155 = vmatpush2.xpose.msra.mxu0 0.0
    %156 = vmatprep.subr.mxu0 0.0
    %157 = vmatpush2.xpose.msra.mxu0 0.0
    %158 = vmatprep.subr.mxu0 0.0
    %159 = vmatpush2.xpose.msra.mxu0 0.0
    %160 = vmatprep.subr.mxu0 0.0
    %161 = vmatpush2.xpose.msra.mxu0 0.0
    %162 = vmatprep.subr.mxu0 0.0
    %163 = vmatpush2.xpose.msra.mxu0 0.0
    %164 = vmatprep.subr.mxu0 0.0
    %165 = vmatpush2.xpose.msra.mxu0 0.0
    %166 = vmatprep.subr.mxu0 0.0
    %167 = vmatpush2.xpose.msra.mxu0 0.0
    %168 = vmatprep.subr.mxu0 0.0
    %169 = vmatpush2.xpose.msra.mxu0 0.0
    %170 = vmatprep.subr.mxu0 0.0
    %171 = vmatpush2.xpose.msra.mxu0 0.0
    %172 = vmatprep.subr.mxu0 0.0
    %173 = vmatpush2.xpose.msra.mxu0 0.0
    %174 = vmatprep.subr.mxu0 0.0
    %175 = vmatpush2.xpose.msra.mxu0 0.0
    %176 = vmatprep.subr.mxu0 0.0
    %177 = vmatpush2.xpose.msra.mxu0 0.0
    %178 = vmatprep.subr.mxu0 0.0
    %179 = vmatpush2.xpose.msra.mxu0 0.0
    %180 = vmatprep.subr.mxu0 0.0
    %181 = vmatpush2.xpose.msra.mxu0 0.0
    %182 = vmatprep.subr.mxu0 0.0
    %183 = vmatpush2.xpose.msra.mxu0 0.0
    %184 = vmatprep.mubr.f32.mxu0 0.0
    %185 = vmatmul.mubr.f32.gmra.mxu0 %v106
    %v186 = vpop.f32.mrf.mxu0
    %v187 = vadd.f32 %v87, %v186
    %v188 = vpop.f32.mrf.mxu0
    %189 = vmatprep.mubr.f32.mxu0 0.0
    %190 = vmatmul.mubr.f32.gmra.mxu0 %v109
    %v191 = vpop.f32.mrf.mxu0
    %v192 = vadd.f32 %v92, %v191
    %v193 = vpop.f32.mrf.mxu0
    %194 = vmatprep.mubr.f32.mxu0 0.0
    %195 = vmatmul.mubr.f32.gmra.mxu0 %v112
    %v196 = vpop.f32.mrf.mxu0
    %v197 = vadd.f32 %v97, %v196
    %v198 = vpop.f32.mrf.mxu0
    %199 = vmatprep.mubr.f32.mxu0 0.0
    %200 = vmatmul.mubr.f32.gmra.mxu0 %v115
    %v201 = vpop.f32.mrf.mxu0
    %v202 = vadd.f32 %v102, %v201
    %v203 = vpop.f32.mrf.mxu0
    %204 = vdwg.mxu0
    %v205 = vmax.f32 %v187, 0.0
    %v206 = vmax.f32 %v192, 0.0
    %v207 = vmax.f32 %v197, 0.0
    %v208 = vmax.f32 %v202, 0.0
    %v209 = vld [vmem:[#allocation9] sm:$0xff]
    %v210 = vld [vmem:[#allocation9 + $0x8] sm:$0xff]
    %v211 = vld [vmem:[#allocation9 + $0x10] sm:$0xff]
    %v212 = vld [vmem:[#allocation9 + $0x18] sm:$0xff]
    %214 = vset.pattern.permute.xlu0 0
    %215 = vperm.xlu0 %214, %v209
    %v216 = vpop.permute.xlu0 %215
    %219 = vset.pattern.permute.xlu0 0
    %220 = vperm.xlu0 %219, %v210
    %v221 = vpop.permute.xlu0 %220
    %224 = vset.pattern.permute.xlu0 0
    %225 = vperm.xlu0 %224, %v211
    %v226 = vpop.permute.xlu0 %225
    %229 = vset.pattern.permute.xlu0 0
    %230 = vperm.xlu0 %229, %v212
    %v231 = vpop.permute.xlu0 %230
    %v233 = vmul.f32 %v205, %v216
    %v234 = vmul.f32 %v206, %v221
    %v235 = vmul.f32 %v207, %v226
    %v236 = vmul.f32 %v208, %v231
    %vm237 = vcmask 64512
    %v238 = vsel %vm237, %v233, 0.0
    %v239 = vsel %vm237, %v234, 0.0
    %v240 = vadd.f32 %v238, %v239
    %v241 = vsel %vm237, %v235, 0.0
    %v242 = vadd.f32 %v240, %v241
    %v243 = vsel %vm237, %v236, 0.0
    %v244 = vadd.f32 %v242, %v243
    %v245 = vrot.slane %v244, 4
    %v246 = vadd.f32 %v244, %v245
    %v247 = vrot.slane %v246, 2
    %v248 = vadd.f32 %v246, %v247
    %v249 = vrot.slane %v248, 1
    %v250 = vadd.f32 %v248, %v249
    %s251 = sld [smem:[#allocation2]]
    %v252 = vstv %s251
    %v253 = vadd.f32 %v250, %v252
    %v254 = vxor.u32 %v253, 2147483648
    %v255 = vmul.f32 %v254, 1.442695
    %v256 = vpow.pop %v255
    %v257 = vadd.f32 %v256, 1.0
    %v258 = vrcp.pop %v257
    %v259 = vmul.f32 1.0, %v258
    %vm260 = vcmask 57344
    %261 = vst.msk [vmem:[#allocation11] sm:$0x1] %vm260, %v259
    // Predicated region
    $region38: #{a_call__.1} parent=1 // pred_check
      _
    $region39: #{a_call__.1} parent=1 // pred_check_branch
      %263 = sbr.rel (0) target = $region41
    $region40: #{a_call__.1} parent=1 // pred_region
      %s265 = ssub.s32 16, 16
      %266 = vsyncadd [#allocation5], %s265
      %s268 = sshll.u32 [#allocation11], 4
      %s269 = int_to_ptr.vmem [resolvable:$true] %s268
      %271 = dma.vmem_to_hbm [thread:$0]  %s269, 16, %s5, [#allocation5]
    $region41: #{a_call__.1} parent=1 // pred_fallthru
      _
    // Predicated region
    $region42: #{a_call__.1} parent=1 // pred_check
      _
    $region43: #{a_call__.1} parent=1 // pred_check_branch
      %273 = sbr.rel (0) target = $region45
    $region44: #{a_call__.1} parent=1 // pred_region
      %274 = dma.done [#allocation5], 16
    $region45: #{a_call__.1} parent=1 // pred_fallthru
      _
    %275 = vsyncpa [#allocation4], 1
    %276 = vsyncpa [#allocation7], 1
    %277 = vsyncpa [#allocation10], 1
    %278 = vsyncpa [#allocation5], 1

</llo_original>
